<compile_context>
chip_gen: v7x
topology: tpu7x:2x2x1
jax: 0.10.0
libtpu: 0.0.40
codegen_flags: <defaults>
</compile_context>

<pallas_src>
import functools

import jax
import jax.numpy as jnp
from jax.experimental import pallas as pl
from jax.experimental.pallas import tpu as pltpu


_LANES = 128                       # lo-split width / lane count
_VPU_VOCAB_MAX = 2048              # e_pad <= this -> dense VPU path
_TILE_H = 128                      # hi-tile rows of the (H, 128) counts layout
_VPU_ONEHOT_BYTES = 4 * 1024 * 1024  # cap on TILE_N * E_pad * 4 in path A
_VMEM_LIMIT_BYTES = 32 * 1024 * 1024


def _round_up(x, m):
    return ((x + m - 1) // m) * m


# --------------------------- Path A: small vocab (VPU) ---------------------------

def _vpu_bincount_kernel(counts_ref, x_ref, out_ref, *, n_total, tile_n, needs_mask):
    """counts_ref/out_ref: (1, E_pad) f32 (grid-resident); x_ref: (tile_n, 1) i32."""
    i = pl.program_id(0)
    e_pad = out_ref.shape[1]

    vals = x_ref[...]                                              # (tile_n, 1)
    if needs_mask:
        pos = i * tile_n + jax.lax.broadcasted_iota(jnp.int32, (tile_n, 1), 0)
        vals = jnp.where(pos < n_total, vals, jnp.int32(-1))       # -1 never matches

    vocab_ids = jax.lax.broadcasted_iota(jnp.int32, (1, e_pad), 1)  # thin row iota
    onehot = (vals == vocab_ids).astype(jnp.float32)                # (tile_n, e_pad)
    partial = jnp.sum(onehot, axis=0, keepdims=True)                # (1, e_pad)

    @pl.when(i == 0)
    def _():
        out_ref[...] = counts_ref[...]

    out_ref[...] += partial


# ---------------------- Path B: large vocab (hi/lo split, MXU) -------------------

def _mxu_bincount_kernel(counts_ref, x_ref, out_ref, *, n_total, tile_n, tile_h,
                         needs_mask):
    """counts_ref/out_ref: (tile_h, 128) f32 tile of the (H, 128) counts layout."""
    j = pl.program_id(0)   # vocab (hi) tile  -- parallel
    i = pl.program_id(1)   # token tile       -- reduction (inner)

    vals = x_ref[...]                                              # (tile_n, 1)
    if needs_mask:
        pos = i * tile_n + jax.lax.broadcasted_iota(jnp.int32, (tile_n, 1), 0)
        vals = jnp.where(pos < n_total, vals, jnp.int32(-1))

    hi = vals >> 7                            # arithmetic shift: -1 stays negative
    lo = vals & (_LANES - 1)
    hi_local = hi - j * tile_h                # out-of-tile ids -> no match

    hi_ids = jax.lax.broadcasted_iota(jnp.int32, (1, tile_h), 1)
    lo_ids = jax.lax.broadcasted_iota(jnp.int32, (1, _LANES), 1)
    onehot_hi = (hi_local == hi_ids).astype(jnp.bfloat16)          # (tile_n, tile_h)
    onehot_lo = (lo == lo_ids).astype(jnp.bfloat16)                # (tile_n, 128)

    # Contract over the token axis on the MXU: (tile_h, 128) f32 partial counts.
    partial = jax.lax.dot_general(
        onehot_hi, onehot_lo,
        dimension_numbers=(((0,), (0,)), ((), ())),
        preferred_element_type=jnp.float32)

    @pl.when(i == 0)
    def _():
        out_ref[...] = counts_ref[...]

    out_ref[...] += partial


# ----------------------------------- wrapper --------------------------------------

@functools.partial(jax.jit, static_argnames=("tile_n",))
def embedding_counter_update(x, counts, *, tile_n=1024):
    """Returns counts + bincount(x.flatten(), minlength=len(counts)), float32.

    NOTE: accumulation stays in float32 to match the PyTorch buffer dtype; counts
    become inexact past 2^24 per bin (same as the original module).
    """
    e = counts.shape[0]
    flat = x.reshape(-1).astype(jnp.int32)
    n = flat.shape[0]
    x_col = flat.reshape(n, 1)                      # no host-side pad of indices

    e_pad_row = _round_up(e, _LANES)

    if e_pad_row <= _VPU_VOCAB_MAX:
        # ---- dense VPU path ----
        cap = max(8, (_VPU_ONEHOT_BYTES // (4 * e_pad_row)) // 8 * 8)
        tile = max(8, min(_round_up(tile_n, 8), _round_up(n, 8), cap))
        g = -(-n // tile)
        needs_mask = (n % tile) != 0

        counts_in = jnp.pad(counts.astype(jnp.float32),
                            (0, e_pad_row - e)).reshape(1, e_pad_row)
        kernel = functools.partial(_vpu_bincount_kernel, n_total=n, tile_n=tile,
                                   needs_mask=needs_mask)
        out = pl.pallas_call(
            kernel,
            out_shape=jax.ShapeDtypeStruct((1, e_pad_row), jnp.float32),
            grid_spec=pltpu.PrefetchScalarGridSpec(
                num_scalar_prefetch=0,
                grid=(g,),
                in_specs=[
                    pl.BlockSpec((1, e_pad_row), lambda i: (0, 0)),
                    pl.BlockSpec((tile, 1), lambda i: (i, 0)),
                ],
                out_specs=pl.BlockSpec((1, e_pad_row), lambda i: (0, 0)),
            ),
            input_output_aliases={0: 0},
            compiler_params=pltpu.CompilerParams(
                dimension_semantics=("arbitrary",),
                vmem_limit_bytes=_VMEM_LIMIT_BYTES),
        )(counts_in, x_col)
        return out[0, :e]

    # ---- hi/lo MXU path with vocab-tiled grid ----
    tile_h = _TILE_H
    e_pad = _round_up(e, _LANES * tile_h)
    h_total = e_pad // _LANES
    num_j = h_total // tile_h

    tile = max(_LANES, min(_round_up(tile_n, _LANES), _round_up(n, _LANES)))
    g = -(-n // tile)
    needs_mask = (n % tile) != 0

    counts_in = jnp.pad(counts.astype(jnp.float32),
                        (0, e_pad - e)).reshape(h_total, _LANES)
    kernel = functools.partial(_mxu_bincount_kernel, n_total=n, tile_n=tile,
                               tile_h=tile_h, needs_mask=needs_mask)
    out = pl.pallas_call(
        kernel,
        out_shape=jax.ShapeDtypeStruct((h_total, _LANES), jnp.float32),
        grid_spec=pltpu.PrefetchScalarGridSpec(
            num_scalar_prefetch=0,
            grid=(num_j, g),
            in_specs=[
                pl.BlockSpec((tile_h, _LANES), lambda j, i: (j, 0)),
                pl.BlockSpec((tile, 1), lambda j, i: (i, 0)),
            ],
            out_specs=pl.BlockSpec((tile_h, _LANES), lambda j, i: (j, 0)),
        ),
        input_output_aliases={0: 0},
        compiler_params=pltpu.CompilerParams(
            dimension_semantics=("parallel", "arbitrary"),
            vmem_limit_bytes=_VMEM_LIMIT_BYTES),
    )(counts_in, x_col)
    return out.reshape(-1)[:e]


# ----------------------------------- module ---------------------------------------

class EmbeddingCounter:
    """JAX/Pallas port of carformer EmbeddingCounter (forward semantics)."""

    def __init__(self, embedding_size):
        self.embedding_size = embedding_size
        self.training_embedding_counts = jnp.zeros((embedding_size,), jnp.float32)
        self.validation_embedding_counts = jnp.zeros((embedding_size,), jnp.float32)
        self.training = True

    def train(self):
        self.training = True

    def eval(self):
        self.training = False

    def __call__(self, x):
        if self.training:
            self.training_embedding_counts = embedding_counter_update(
                x, self.training_embedding_counts)
        else:
            self.validation_embedding_counts = embedding_counter_update(
                x, self.validation_embedding_counts)

    def get_training_embedding_counts(self):
        return self.training_embedding_counts

    def get_validation_embedding_counts(self):
        return self.validation_embedding_counts

    def reset_training_embedding_counts(self):
        self.training_embedding_counts = jnp.zeros_like(self.training_embedding_counts)

    def reset_validation_embedding_counts(self):
        self.validation_embedding_counts = jnp.zeros_like(self.validation_embedding_counts)

    def reset(self):
        self.reset_training_embedding_counts()
        self.reset_validation_embedding_counts()

    def check_out_of_distribution(self, x=None):
        if self.training:
            return False
        if x is not None:
            cnt = embedding_counter_update(
                x, jnp.zeros_like(self.validation_embedding_counts))
            return bool(jnp.any(cnt * (self.training_embedding_counts == 0)))
        return bool(jnp.any(self.validation_embedding_counts
                            * (self.training_embedding_counts == 0)))

    def print_stats(self, verbose=False, print_counts=False, offset_map=None,
                    quant_vocab_size=None):
        t, v = self.training_embedding_counts, self.validation_embedding_counts
        train_unused = int(jnp.sum(t == 0))
        val_unused = int(jnp.sum(v == 0))
        train_not_val = int(jnp.sum((t > 0) & (v == 0)))
        val_not_train = int(jnp.sum((t == 0) & (v > 0)))
        if print_counts:
            if verbose:
                print("Training embedding counts:\n", jax.device_get(t))
                print("Validation embedding counts:\n", jax.device_get(v))
            print("Number unused embeddings in training: ", train_unused)
            print("Number unused embeddings in validation: ", val_unused)
            print("Number of embeddings used in training but not validation: ", train_not_val)
            print("Number of embeddings used in validation but not training: ", val_not_train)
        return "[T:{}|V:{}|T/V:{}|V/T:{}]".format(
            train_unused, val_unused, train_not_val, val_not_train)


if __name__ == "__main__":
    key = jax.random.PRNGKey(0)
    k1, k2, k3, k4 = jax.random.split(key, 4)

    # --- primary flow (matches the module usage): vocab 256, x (2, 4, 32) ---
    embedding_size = 256
    x = jax.random.randint(k1, (2, 4, 32), 0, embedding_size, dtype=jnp.int32)

    counter = EmbeddingCounter(embedding_size)
    counter.train()
    counter(x)
    counter(x)
    counter.eval()
    counter(x)

    train_counts = jax.block_until_ready(counter.get_training_embedding_counts())
    val_counts = jax.block_until_ready(counter.get_validation_embedding_counts())
    ref = jnp.bincount(x.reshape(-1), length=embedding_size).astype(jnp.float32)
    assert jnp.array_equal(train_counts, 2.0 * ref), "training counts mismatch"
    assert jnp.array_equal(val_counts, ref), "validation counts mismatch"
    assert not counter.check_out_of_distribution()

    # --- ragged tail + multiple token tiles (VPU path) ---
    x2 = jax.random.randint(k2, (8, 125), 0, embedding_size, dtype=jnp.int32)
    got2 = jax.block_until_ready(
        embedding_counter_update(x2, jnp.zeros((embedding_size,), jnp.float32),
                                 tile_n=64))
    ref2 = jnp.bincount(x2.reshape(-1), length=embedding_size).astype(jnp.float32)
    assert jnp.array_equal(got2, ref2), "VPU ragged-tail counts mismatch"

    # --- large vocab -> hi/lo MXU path with vocab-tiled (parallel) grid ---
    big_vocab = 20000
    x3 = jax.random.randint(k3, (5, 500), 0, big_vocab, dtype=jnp.int32)
    base3 = jax.random.randint(k4, (big_vocab,), 0, 3, dtype=jnp.int32).astype(jnp.float32)
    got3 = jax.block_until_ready(embedding_counter_update(x3, base3))
    ref3 = base3 + jnp.bincount(x3.reshape(-1), length=big_vocab).astype(jnp.float32)
    assert jnp.array_equal(got3, ref3), "MXU hi/lo counts mismatch"

    print("KERNEL_OK")
</pallas_src>

<mosaic_0001>
module attributes {stable_mosaic.version = 11 : i64} {
  func.func @_vpu_bincount_kernel(%arg0: i32, %arg1: memref<1x256xf32, #tpu.memory_space<vmem>>, %arg2: memref<256x1xi32, #tpu.memory_space<vmem>>, %arg3: memref<1x256xf32, #tpu.memory_space<vmem>>) attributes {dimension_semantics = [#tpu.dimension_semantics<arbitrary>], iteration_bounds = array<i64: 1>, scalar_prefetch = 0 : i64, scratch_operands = 0 : i64, tpu.core_type = #tpu.core_type<tc>, window_params = [{pipeline_mode = #tpu.pipeline_mode<synchronous>, transform_indices = @transform_0, window_bounds = array<i64: 1, 256>}, {transform_indices = @transform_1, window_bounds = array<i64: 256, 1>}, {pipeline_mode = #tpu.pipeline_mode<synchronous>, transform_indices = @transform_2, window_bounds = array<i64: 1, 256>}]} {
    %c0 = arith.constant 0 : index
    %c0_0 = arith.constant 0 : index
    %0 = vector.load %arg2[%c0, %c0_0] : memref<256x1xi32, #tpu.memory_space<vmem>>, vector<256x1xi32>
    %1 = tpu.iota {dimensions = array<i32: 1>} : vector<1x256xi32>
    %2 = vector.broadcast %0 : vector<256x1xi32> to vector<256x256xi32>
    %3 = vector.broadcast %1 : vector<1x256xi32> to vector<256x256xi32>
    %4 = arith.cmpi eq, %2, %3 : vector<256x256xi32>
    %5 = arith.extui %4 : vector<256x256xi1> to vector<256x256xi32>
    %6 = arith.sitofp %5 : vector<256x256xi32> to vector<256x256xf32>
    %cst = arith.constant dense<0.000000e+00> : vector<256xf32>
    %7 = vector.multi_reduction <add>, %6, %cst [0] : vector<256x256xf32> to vector<256xf32>
    %8 = vector.shape_cast %7 : vector<256xf32> to vector<1x256xf32>
    %c0_i32 = arith.constant 0 : i32
    %9 = arith.cmpi eq, %arg0, %c0_i32 : i32
    %10 = arith.extui %9 : i1 to i32
    %c0_i32_1 = arith.constant 0 : i32
    %11 = arith.cmpi ne, %10, %c0_i32_1 : i32
    scf.if %11 {
      %c0_6 = arith.constant 0 : index
      %c0_7 = arith.constant 0 : index
      %15 = vector.load %arg1[%c0_6, %c0_7] : memref<1x256xf32, #tpu.memory_space<vmem>>, vector<1x256xf32>
      %c0_8 = arith.constant 0 : index
      %c0_9 = arith.constant 0 : index
      %16 = vector.load %arg3[%c0_8, %c0_9] : memref<1x256xf32, #tpu.memory_space<vmem>>, vector<1x256xf32>
      tpu.vector_store %arg3[%c0_8, %c0_9], %15 {strides = array<i32>} : memref<1x256xf32, #tpu.memory_space<vmem>>, vector<1x256xf32>,
    } else {
    }
    %c0_2 = arith.constant 0 : index
    %c0_3 = arith.constant 0 : index
    %12 = vector.load %arg3[%c0_2, %c0_3] : memref<1x256xf32, #tpu.memory_space<vmem>>, vector<1x256xf32>
    %13 = arith.addf %12, %8 : vector<1x256xf32>
    %c0_4 = arith.constant 0 : index
    %c0_5 = arith.constant 0 : index
    %14 = vector.load %arg3[%c0_4, %c0_5] : memref<1x256xf32, #tpu.memory_space<vmem>>, vector<1x256xf32>
    tpu.vector_store %arg3[%c0_4, %c0_5], %13 {strides = array<i32>} : memref<1x256xf32, #tpu.memory_space<vmem>>, vector<1x256xf32>,
    return
  }
  func.func @transform_0(%arg0: i32) -> (i32, i32) {
    %c0_i32 = arith.constant 0 : i32
    %c0_i32_0 = arith.constant 0 : i32
    %c0_i32_1 = arith.constant 0 : i32
    return %c0_i32, %c0_i32_0 : i32, i32
  }
  func.func @transform_1(%arg0: i32) -> (i32, i32) {
    %c0_i32 = arith.constant 0 : i32
    %c0_i32_0 = arith.constant 0 : i32
    return %arg0, %c0_i32 : i32, i32
  }
  func.func @transform_2(%arg0: i32) -> (i32, i32) {
    %c0_i32 = arith.constant 0 : i32
    %c0_i32_0 = arith.constant 0 : i32
    %c0_i32_1 = arith.constant 0 : i32
    return %c0_i32, %c0_i32_0 : i32, i32
  }
}

</mosaic_0001>

<llo_original>
// kernel: embedding_counter_update.1
$region0: #{embedding_counter_update.1}
  #allocation0 [shape = 'u32[]', space=smem, size = 0x4, offset = 0x4, fixed_abs, tag = 'smem constant byte address 0x4 - core index']
  #allocation1 [shape = 'u32[144,128]{1,0:T(1,128)}', space=vmem, size = 0x12000, scoped, tag = 'internal scratch']
  %s0 = inlined_call_operand.vmem [shape: f32[1,256], index: 0, kind: input, shape index: {}, may-alias: {0,2}]
  %s1 = inlined_call_operand.vmem [shape: s32[256,1], index: 1, kind: input, shape index: {}]
  %s2 = inlined_call_operand.vmem [shape: f32[1,256], index: 2, kind: output, shape index: {}, may-alias: {0,2}]
  %s3 = sld [smem:[#allocation0]]
  $region22: #{embedding_counter_update.1} parent=0
    _
  %s5 = ssub.s32 1, %s3
  %s6 = scalar_select 0, %s5, %s3
  // Predicated region
  $region2: #{embedding_counter_update.1} parent=0 // pred_check
    _
  $region3: #{embedding_counter_update.1} parent=0 // pred_check_branch
    %8 = sbr.rel (0) target = $region5
  $region4: #{embedding_counter_update.1} parent=0 // pred_region
    _
  $region5: #{embedding_counter_update.1} parent=0 // pred_fallthru
    _
  // Predicated region
  $region6: #{embedding_counter_update.1} parent=0 // pred_check
    _
  $region7: #{embedding_counter_update.1} parent=0 // pred_check_branch
    %10 = sbr.rel (0) target = $region9
  $region8: #{embedding_counter_update.1} parent=0 // pred_region
    _
  $region9: #{embedding_counter_update.1} parent=0 // pred_fallthru
    _
  %v11 = vld [vmem:[%s1] sm:$0xff]
  %v12 = vld [vmem:[%s1 + $0x8] sm:$0xff]
  %v13 = vld [vmem:[%s1 + $0x10] sm:$0xff]
  %v14 = vld [vmem:[%s1 + $0x18] sm:$0xff]
  %v15 = vld [vmem:[%s1 + $0x20] sm:$0xff]
  %v16 = vld [vmem:[%s1 + $0x28] sm:$0xff]
  %v17 = vld [vmem:[%s1 + $0x30] sm:$0xff]
  %v18 = vld [vmem:[%s1 + $0x38] sm:$0xff]
  %v19 = vld [vmem:[%s1 + $0x40] sm:$0xff]
  %v20 = vld [vmem:[%s1 + $0x48] sm:$0xff]
  %v21 = vld [vmem:[%s1 + $0x50] sm:$0xff]
  %v22 = vld [vmem:[%s1 + $0x58] sm:$0xff]
  %v23 = vld [vmem:[%s1 + $0x60] sm:$0xff]
  %v24 = vld [vmem:[%s1 + $0x68] sm:$0xff]
  %v25 = vld [vmem:[%s1 + $0x70] sm:$0xff]
  %v26 = vld [vmem:[%s1 + $0x78] sm:$0xff]
  %v27 = vld [vmem:[%s1 + $0x80] sm:$0xff]
  %v28 = vld [vmem:[%s1 + $0x88] sm:$0xff]
  %v29 = vld [vmem:[%s1 + $0x90] sm:$0xff]
  %v30 = vld [vmem:[%s1 + $0x98] sm:$0xff]
  %v31 = vld [vmem:[%s1 + $0xa0] sm:$0xff]
  %v32 = vld [vmem:[%s1 + $0xa8] sm:$0xff]
  %v33 = vld [vmem:[%s1 + $0xb0] sm:$0xff]
  %v34 = vld [vmem:[%s1 + $0xb8] sm:$0xff]
  %v35 = vld [vmem:[%s1 + $0xc0] sm:$0xff]
  %v36 = vld [vmem:[%s1 + $0xc8] sm:$0xff]
  %v37 = vld [vmem:[%s1 + $0xd0] sm:$0xff]
  %v38 = vld [vmem:[%s1 + $0xd8] sm:$0xff]
  %v39 = vld [vmem:[%s1 + $0xe0] sm:$0xff]
  %v40 = vld [vmem:[%s1 + $0xe8] sm:$0xff]
  %v41 = vld [vmem:[%s1 + $0xf0] sm:$0xff]
  %v42 = vld [vmem:[%s1 + $0xf8] sm:$0xff]
  %v43 = vlaneseq
  %v44 = vand.u32 %v43, 127
  %v45 = vadd.s32 %v44, 128
  %46 = vset.pattern.permute.xlu0 0
  %47 = vperm.xlu0 %46, %v11
  %v48 = vpop.permute.xlu0 %47
  %49 = vset.pattern.permute.xlu0 0
  %50 = vperm.xlu0 %49, %v12
  %v51 = vpop.permute.xlu0 %50
  %52 = vset.pattern.permute.xlu0 0
  %53 = vperm.xlu0 %52, %v13
  %v54 = vpop.permute.xlu0 %53
  %55 = vset.pattern.permute.xlu0 0
  %56 = vperm.xlu0 %55, %v14
  %v57 = vpop.permute.xlu0 %56
  %58 = vset.pattern.permute.xlu0 0
  %59 = vperm.xlu0 %58, %v15
  %v60 = vpop.permute.xlu0 %59
  %61 = vset.pattern.permute.xlu0 0
  %62 = vperm.xlu0 %61, %v16
  %v63 = vpop.permute.xlu0 %62
  %64 = vset.pattern.permute.xlu0 0
  %65 = vperm.xlu0 %64, %v17
  %v66 = vpop.permute.xlu0 %65
  %67 = vset.pattern.permute.xlu0 0
  %68 = vperm.xlu0 %67, %v18
  %v69 = vpop.permute.xlu0 %68
  %70 = vset.pattern.permute.xlu0 0
  %71 = vperm.xlu0 %70, %v19
  %v72 = vpop.permute.xlu0 %71
  %73 = vset.pattern.permute.xlu0 0
  %74 = vperm.xlu0 %73, %v20
  %v75 = vpop.permute.xlu0 %74
  %76 = vset.pattern.permute.xlu0 0
  %77 = vperm.xlu0 %76, %v21
  %v78 = vpop.permute.xlu0 %77
  %79 = vset.pattern.permute.xlu0 0
  %80 = vperm.xlu0 %79, %v22
  %v81 = vpop.permute.xlu0 %80
  %82 = vset.pattern.permute.xlu0 0
  %83 = vperm.xlu0 %82, %v23
  %v84 = vpop.permute.xlu0 %83
  %85 = vset.pattern.permute.xlu0 0
  %86 = vperm.xlu0 %85, %v24
  %v87 = vpop.permute.xlu0 %86
  %88 = vset.pattern.permute.xlu0 0
  %89 = vperm.xlu0 %88, %v25
  %v90 = vpop.permute.xlu0 %89
  %91 = vset.pattern.permute.xlu0 0
  %92 = vperm.xlu0 %91, %v26
  %v93 = vpop.permute.xlu0 %92
  %94 = vset.pattern.permute.xlu0 0
  %95 = vperm.xlu0 %94, %v27
  %v96 = vpop.permute.xlu0 %95
  %97 = vset.pattern.permute.xlu0 0
  %98 = vperm.xlu0 %97, %v28
  %v99 = vpop.permute.xlu0 %98
  %100 = vset.pattern.permute.xlu0 0
  %101 = vperm.xlu0 %100, %v29
  %v102 = vpop.permute.xlu0 %101
  %103 = vset.pattern.permute.xlu0 0
  %104 = vperm.xlu0 %103, %v30
  %v105 = vpop.permute.xlu0 %104
  %106 = vset.pattern.permute.xlu0 0
  %107 = vperm.xlu0 %106, %v31
  %v108 = vpop.permute.xlu0 %107
  %109 = vset.pattern.permute.xlu0 0
  %110 = vperm.xlu0 %109, %v32
  %v111 = vpop.permute.xlu0 %110
  %112 = vset.pattern.permute.xlu0 0
  %113 = vperm.xlu0 %112, %v33
  %v114 = vpop.permute.xlu0 %113
  %115 = vset.pattern.permute.xlu0 0
  %116 = vperm.xlu0 %115, %v34
  %v117 = vpop.permute.xlu0 %116
  %118 = vset.pattern.permute.xlu0 0
  %119 = vperm.xlu0 %118, %v35
  %v120 = vpop.permute.xlu0 %119
  %121 = vset.pattern.permute.xlu0 0
  %122 = vperm.xlu0 %121, %v36
  %v123 = vpop.permute.xlu0 %122
  %124 = vset.pattern.permute.xlu0 0
  %125 = vperm.xlu0 %124, %v37
  %v126 = vpop.permute.xlu0 %125
  %127 = vset.pattern.permute.xlu0 0
  %128 = vperm.xlu0 %127, %v38
  %v129 = vpop.permute.xlu0 %128
  %130 = vset.pattern.permute.xlu0 0
  %131 = vperm.xlu0 %130, %v39
  %v132 = vpop.permute.xlu0 %131
  %133 = vset.pattern.permute.xlu0 0
  %134 = vperm.xlu0 %133, %v40
  %v135 = vpop.permute.xlu0 %134
  %136 = vset.pattern.permute.xlu0 0
  %137 = vperm.xlu0 %136, %v41
  %v138 = vpop.permute.xlu0 %137
  %139 = vset.pattern.permute.xlu0 0
  %140 = vperm.xlu0 %139, %v42
  %v141 = vpop.permute.xlu0 %140
  %vm142 = vcmp.eq.s32.totalorder %v48, %v44
  %vm143 = vcmp.eq.s32.totalorder %v48, %v45
  %vm144 = vcmp.eq.s32.totalorder %v51, %v44
  %vm145 = vcmp.eq.s32.totalorder %v51, %v45
  %vm146 = vcmp.eq.s32.totalorder %v54, %v44
  %vm147 = vcmp.eq.s32.totalorder %v54, %v45
  %vm148 = vcmp.eq.s32.totalorder %v57, %v44
  %vm149 = vcmp.eq.s32.totalorder %v57, %v45
  %vm150 = vcmp.eq.s32.totalorder %v60, %v44
  %vm151 = vcmp.eq.s32.totalorder %v60, %v45
  %vm152 = vcmp.eq.s32.totalorder %v63, %v44
  %vm153 = vcmp.eq.s32.totalorder %v63, %v45
  %vm154 = vcmp.eq.s32.totalorder %v66, %v44
  %vm155 = vcmp.eq.s32.totalorder %v66, %v45
  %vm156 = vcmp.eq.s32.totalorder %v69, %v44
  %vm157 = vcmp.eq.s32.totalorder %v69, %v45
  %vm158 = vcmp.eq.s32.totalorder %v72, %v44
  %vm159 = vcmp.eq.s32.totalorder %v72, %v45
  %vm160 = vcmp.eq.s32.totalorder %v75, %v44
  %vm161 = vcmp.eq.s32.totalorder %v75, %v45
  %vm162 = vcmp.eq.s32.totalorder %v78, %v44
  %vm163 = vcmp.eq.s32.totalorder %v78, %v45
  %vm164 = vcmp.eq.s32.totalorder %v81, %v44
  %vm165 = vcmp.eq.s32.totalorder %v81, %v45
  %vm166 = vcmp.eq.s32.totalorder %v84, %v44
  %vm167 = vcmp.eq.s32.totalorder %v84, %v45
  %vm168 = vcmp.eq.s32.totalorder %v87, %v44
  %vm169 = vcmp.eq.s32.totalorder %v87, %v45
  %vm170 = vcmp.eq.s32.totalorder %v90, %v44
  %vm171 = vcmp.eq.s32.totalorder %v90, %v45
  %vm172 = vcmp.eq.s32.totalorder %v93, %v44
  %vm173 = vcmp.eq.s32.totalorder %v93, %v45
  %vm174 = vcmp.eq.s32.totalorder %v96, %v44
  %vm175 = vcmp.eq.s32.totalorder %v96, %v45
  %vm176 = vcmp.eq.s32.totalorder %v99, %v44
  %vm177 = vcmp.eq.s32.totalorder %v99, %v45
  %vm178 = vcmp.eq.s32.totalorder %v102, %v44
  %vm179 = vcmp.eq.s32.totalorder %v102, %v45
  %vm180 = vcmp.eq.s32.totalorder %v105, %v44
  %vm181 = vcmp.eq.s32.totalorder %v105, %v45
  %vm182 = vcmp.eq.s32.totalorder %v108, %v44
  %vm183 = vcmp.eq.s32.totalorder %v108, %v45
  %vm184 = vcmp.eq.s32.totalorder %v111, %v44
  %vm185 = vcmp.eq.s32.totalorder %v111, %v45
  %vm186 = vcmp.eq.s32.totalorder %v114, %v44
  %vm187 = vcmp.eq.s32.totalorder %v114, %v45
  %vm188 = vcmp.eq.s32.totalorder %v117, %v44
  %vm189 = vcmp.eq.s32.totalorder %v117, %v45
  %vm190 = vcmp.eq.s32.totalorder %v120, %v44
  %vm191 = vcmp.eq.s32.totalorder %v120, %v45
  %vm192 = vcmp.eq.s32.totalorder %v123, %v44
  %vm193 = vcmp.eq.s32.totalorder %v123, %v45
  %vm194 = vcmp.eq.s32.totalorder %v126, %v44
  %vm195 = vcmp.eq.s32.totalorder %v126, %v45
  %vm196 = vcmp.eq.s32.totalorder %v129, %v44
  %vm197 = vcmp.eq.s32.totalorder %v129, %v45
  %vm198 = vcmp.eq.s32.totalorder %v132, %v44
  %vm199 = vcmp.eq.s32.totalorder %v132, %v45
  %vm200 = vcmp.eq.s32.totalorder %v135, %v44
  %vm201 = vcmp.eq.s32.totalorder %v135, %v45
  %vm202 = vcmp.eq.s32.totalorder %v138, %v44
  %vm203 = vcmp.eq.s32.totalorder %v138, %v45
  %vm204 = vcmp.eq.s32.totalorder %v141, %v44
  %vm205 = vcmp.eq.s32.totalorder %v141, %v45
  %v206 = vsel %vm142, 1, 0
  %v207 = vsel %vm143, 1, 0
  %v208 = vsel %vm144, 1, 0
  %v209 = vsel %vm145, 1, 0
  %v210 = vsel %vm146, 1, 0
  %v211 = vsel %vm147, 1, 0
  %v212 = vsel %vm148, 1, 0
  %v213 = vsel %vm149, 1, 0
  %v214 = vsel %vm150, 1, 0
  %v215 = vsel %vm151, 1, 0
  %v216 = vsel %vm152, 1, 0
  %v217 = vsel %vm153, 1, 0
  %v218 = vsel %vm154, 1, 0
  %v219 = vsel %vm155, 1, 0
  %v220 = vsel %vm156, 1, 0
  %v221 = vsel %vm157, 1, 0
  %v222 = vsel %vm158, 1, 0
  %v223 = vsel %vm159, 1, 0
  %v224 = vsel %vm160, 1, 0
  %v225 = vsel %vm161, 1, 0
  %v226 = vsel %vm162, 1, 0
  %v227 = vsel %vm163, 1, 0
  %v228 = vsel %vm164, 1, 0
  %v229 = vsel %vm165, 1, 0
  %v230 = vsel %vm166, 1, 0
  %v231 = vsel %vm167, 1, 0
  %v232 = vsel %vm168, 1, 0
  %v233 = vsel %vm169, 1, 0
  %v234 = vsel %vm170, 1, 0
  %v235 = vsel %vm171, 1, 0
  %v236 = vsel %vm172, 1, 0
  %v237 = vsel %vm173, 1, 0
  %v238 = vsel %vm174, 1, 0
  %v239 = vsel %vm175, 1, 0
  %v240 = vsel %vm176, 1, 0
  %v241 = vsel %vm177, 1, 0
  %v242 = vsel %vm178, 1, 0
  %v243 = vsel %vm179, 1, 0
  %v244 = vsel %vm180, 1, 0
  %v245 = vsel %vm181, 1, 0
  %v246 = vsel %vm182, 1, 0
  %v247 = vsel %vm183, 1, 0
  %v248 = vsel %vm184, 1, 0
  %v249 = vsel %vm185, 1, 0
  %v250 = vsel %vm186, 1, 0
  %v251 = vsel %vm187, 1, 0
  %v252 = vsel %vm188, 1, 0
  %v253 = vsel %vm189, 1, 0
  %v254 = vsel %vm190, 1, 0
  %v255 = vsel %vm191, 1, 0
  %v256 = vsel %vm192, 1, 0
  %v257 = vsel %vm193, 1, 0
  %v258 = vsel %vm194, 1, 0
  %v259 = vsel %vm195, 1, 0
  %v260 = vsel %vm196, 1, 0
  %v261 = vsel %vm197, 1, 0
  %v262 = vsel %vm198, 1, 0
  %v263 = vsel %vm199, 1, 0
  %v264 = vsel %vm200, 1, 0
  %v265 = vsel %vm201, 1, 0
  %v266 = vsel %vm202, 1, 0
  %v267 = vsel %vm203, 1, 0
  %v268 = vsel %vm204, 1, 0
  %v269 = vsel %vm205, 1, 0
  %v270 = vcvt.s32.f32 %v206
  %v271 = vcvt.s32.f32 %v207
  %v272 = vcvt.s32.f32 %v208
  %v273 = vcvt.s32.f32 %v209
  %v274 = vcvt.s32.f32 %v210
  %v275 = vcvt.s32.f32 %v211
  %v276 = vcvt.s32.f32 %v212
  %v277 = vcvt.s32.f32 %v213
  %v278 = vcvt.s32.f32 %v214
  %v279 = vcvt.s32.f32 %v215
  %v280 = vcvt.s32.f32 %v216
  %v281 = vcvt.s32.f32 %v217
  %v282 = vcvt.s32.f32 %v218
  %v283 = vcvt.s32.f32 %v219
  %v284 = vcvt.s32.f32 %v220
  %v285 = vcvt.s32.f32 %v221
  %v286 = vcvt.s32.f32 %v222
  %v287 = vcvt.s32.f32 %v223
  %v288 = vcvt.s32.f32 %v224
  %v289 = vcvt.s32.f32 %v225
  %v290 = vcvt.s32.f32 %v226
  %v291 = vcvt.s32.f32 %v227
  %v292 = vcvt.s32.f32 %v228
  %v293 = vcvt.s32.f32 %v229
  %v294 = vcvt.s32.f32 %v230
  %v295 = vcvt.s32.f32 %v231
  %v296 = vcvt.s32.f32 %v232
  %v297 = vcvt.s32.f32 %v233
  %v298 = vcvt.s32.f32 %v234
  %v299 = vcvt.s32.f32 %v235
  %v300 = vcvt.s32.f32 %v236
  %v301 = vcvt.s32.f32 %v237
  %v302 = vcvt.s32.f32 %v238
  %v303 = vcvt.s32.f32 %v239
  %v304 = vcvt.s32.f32 %v240
  %v305 = vcvt.s32.f32 %v241
  %v306 = vcvt.s32.f32 %v242
  %v307 = vcvt.s32.f32 %v243
  %v308 = vcvt.s32.f32 %v244
  %v309 = vcvt.s32.f32 %v245
  %v310 = vcvt.s32.f32 %v246
  %v311 = vcvt.s32.f32 %v247
  %v312 = vcvt.s32.f32 %v248
  %v313 = vcvt.s32.f32 %v249
  %v314 = vcvt.s32.f32 %v250
  %v315 = vcvt.s32.f32 %v251
  %v316 = vcvt.s32.f32 %v252
  %v317 = vcvt.s32.f32 %v253
  %v318 = vcvt.s32.f32 %v254
  %v319 = vcvt.s32.f32 %v255
  %v320 = vcvt.s32.f32 %v256
  %v321 = vcvt.s32.f32 %v257
  %v322 = vcvt.s32.f32 %v258
  %v323 = vcvt.s32.f32 %v259
  %v324 = vcvt.s32.f32 %v260
  %v325 = vcvt.s32.f32 %v261
  %v326 = vcvt.s32.f32 %v262
  %v327 = vcvt.s32.f32 %v263
  %v328 = vcvt.s32.f32 %v264
  %v329 = vcvt.s32.f32 %v265
  %v330 = vcvt.s32.f32 %v266
  %v331 = vcvt.s32.f32 %v267
  %v332 = vcvt.s32.f32 %v268
  %v333 = vcvt.s32.f32 %v269
  %v334 = vadd.f32 %v270, %v272
  %v335 = vadd.f32 %v334, %v274
  %v336 = vadd.f32 %v335, %v276
  %v337 = vadd.f32 %v336, %v278
  %v338 = vadd.f32 %v337, %v280
  %v339 = vadd.f32 %v338, %v282
  %v340 = vadd.f32 %v339, %v284
  %v341 = vadd.f32 %v340, %v286
  %v342 = vadd.f32 %v341, %v288
  %v343 = vadd.f32 %v342, %v290
  %v344 = vadd.f32 %v343, %v292
  %v345 = vadd.f32 %v344, %v294
  %v346 = vadd.f32 %v345, %v296
  %v347 = vadd.f32 %v346, %v298
  %v348 = vadd.f32 %v347, %v300
  %v349 = vadd.f32 %v348, %v302
  %v350 = vadd.f32 %v349, %v304
  %v351 = vadd.f32 %v350, %v306
  %v352 = vadd.f32 %v351, %v308
  %v353 = vadd.f32 %v352, %v310
  %v354 = vadd.f32 %v353, %v312
  %v355 = vadd.f32 %v354, %v314
  %v356 = vadd.f32 %v355, %v316
  %v357 = vadd.f32 %v356, %v318
  %v358 = vadd.f32 %v357, %v320
  %v359 = vadd.f32 %v358, %v322
  %v360 = vadd.f32 %v359, %v324
  %v361 = vadd.f32 %v360, %v326
  %v362 = vadd.f32 %v361, %v328
  %v363 = vadd.f32 %v362, %v330
  %v364 = vadd.f32 %v363, %v332
  %v365 = vrot.slane %v364, 4
  %v366 = vadd.f32 %v364, %v365
  %v367 = vrot.slane %v366, 2
  %v368 = vadd.f32 %v366, %v367
  %v369 = vrot.slane %v368, 1
  %v370 = vadd.f32 %v368, %v369
  %v371 = vadd.f32 %v271, %v273
  %v372 = vadd.f32 %v371, %v275
  %v373 = vadd.f32 %v372, %v277
  %v374 = vadd.f32 %v373, %v279
  %v375 = vadd.f32 %v374, %v281
  %v376 = vadd.f32 %v375, %v283
  %v377 = vadd.f32 %v376, %v285
  %v378 = vadd.f32 %v377, %v287
  %v379 = vadd.f32 %v378, %v289
  %v380 = vadd.f32 %v379, %v291
  %v381 = vadd.f32 %v380, %v293
  %v382 = vadd.f32 %v381, %v295
  %v383 = vadd.f32 %v382, %v297
  %v384 = vadd.f32 %v383, %v299
  %v385 = vadd.f32 %v384, %v301
  %v386 = vadd.f32 %v385, %v303
  %v387 = vadd.f32 %v386, %v305
  %v388 = vadd.f32 %v387, %v307
  %v389 = vadd.f32 %v388, %v309
  %v390 = vadd.f32 %v389, %v311
  %v391 = vadd.f32 %v390, %v313
  %v392 = vadd.f32 %v391, %v315
  %v393 = vadd.f32 %v392, %v317
  %v394 = vadd.f32 %v393, %v319
  %v395 = vadd.f32 %v394, %v321
  %v396 = vadd.f32 %v395, %v323
  %v397 = vadd.f32 %v396, %v325
  %v398 = vadd.f32 %v397, %v327
  %v399 = vadd.f32 %v398, %v329
  %v400 = vadd.f32 %v399, %v331
  %v401 = vadd.f32 %v400, %v333
  %v402 = vrot.slane %v401, 4
  %v403 = vadd.f32 %v401, %v402
  %v404 = vrot.slane %v403, 2
  %v405 = vadd.f32 %v403, %v404
  %v406 = vrot.slane %v405, 1
  %v407 = vadd.f32 %v405, %v406
  %p408 = scmp.eq.s32.totalorder 0, 0
  // Predicated region
  $region10: #{embedding_counter_update.1} parent=0 // pred_check
    %p409 = pneg %p408
  $region11: #{embedding_counter_update.1} parent=0 // pred_check_branch
    %411 = sbr.rel (%p409) target = $region13
  $region12: #{embedding_counter_update.1} parent=0 // pred_region
    %v412 = vld [vmem:[%s0] sm:$0x3]
    %v413 = vlaneseq
    %vm414 = vcmp.ge.s32.totalorder %v413, 0
    %vm415 = vcmp.lt.s32.totalorder %v413, 256
    %vm416 = vmand %vm414, %vm415
    %417 = vst.msk [vmem:[%s2] sm:$0x3] %vm416, %v412
  $region13: #{embedding_counter_update.1} parent=0 // pred_fallthru
    _
  %v418 = vld [vmem:[%s2] sm:$0x3]
  %v421 = vcombine.low %v370, %v407
  %v423 = vunpack.c.l.s4 1966171168
  %v424 = vunpack.c.0.s8 %v423
  %v425 = vlaneseq
  %v426 = vshrl.u32 %v425, 7
  %v427 = vsub.s32 %v424, %v426
  %v428 = vrot.slane %v421, %v427
  %v430 = vunpack.c.l.s4 1966171168
  %v431 = vunpack.c.0.s8 %v430
  %v432 = vlaneseq
  %v433 = vshrl.u32 %v432, 7
  %v434 = vsub.s32 %v431, %v433
  %v435 = vrot.slane %v428, %v434
  %v437 = vadd.f32 %v418, %v435
  %v438 = vlaneseq
  %vm439 = vcmp.ge.s32.totalorder %v438, 0
  %vm440 = vcmp.lt.s32.totalorder %v438, 256
  %vm441 = vmand %vm439, %vm440
  %442 = vst.msk [vmem:[%s2] sm:$0x3] %vm441, %v437
  // Predicated region
  $region14: #{embedding_counter_update.1} parent=0 // pred_check
    _
  $region15: #{embedding_counter_update.1} parent=0 // pred_check_branch
    %444 = sbr.rel (0) target = $region17
  $region16: #{embedding_counter_update.1} parent=0 // pred_region
    _
  $region17: #{embedding_counter_update.1} parent=0 // pred_fallthru
    _
  // Predicated region
  $region18: #{embedding_counter_update.1} parent=0 // pred_check
    _
  $region19: #{embedding_counter_update.1} parent=0 // pred_check_branch
    %446 = sbr.rel (0) target = $region21
  $region20: #{embedding_counter_update.1} parent=0 // pred_region
    _
  $region21: #{embedding_counter_update.1} parent=0 // pred_fallthru
    _

</llo_original>
